<compile_context>
chip_gen: v5e
topology: v5e:2x2
jax: 0.10.0
libtpu: 0.0.40
codegen_flags: <defaults>
</compile_context>

<pallas_src>
import jax
import jax.numpy as jnp
from jax import lax
from jax.experimental import pallas as pl
from jax.experimental.pallas import tpu as pltpu


def _round_up(x, m):
    return ((x + m - 1) // m) * m


def decoder_kernel(z_ref, w1_ref, b1_ref, w2_ref, b2_ref, w3_ref, b3_ref, o_ref):
    hp = lax.Precision.HIGHEST  # exact f32 math; compute is not the bottleneck

    z = z_ref[...]                                               # (Tb, L) batch-major

    # Layer 1: h1 = W1 @ z^T via an rhs-transposed contraction (no explicit
    # transpose of the big z block).  Result is feature-major (8, Tb).
    h = lax.dot_general(
        w1_ref[...], z, (((1,), (1,)), ((), ())),
        preferred_element_type=jnp.float32, precision=hp)        # (8, Tb)
    h = jnp.maximum(h + b1_ref[...], 0.0)

    # Layer 2: standard matmul, stays feature-major.
    h = jnp.dot(w2_ref[...], h,
                preferred_element_type=jnp.float32, precision=hp)  # (16, Tb)
    h = jnp.maximum(h + b2_ref[...], 0.0)

    # Layer 3: standard matmul, feature-major result + (O, 1) bias column.
    y = jnp.dot(w3_ref[...], h,
                preferred_element_type=jnp.float32, precision=hp)  # (O, Tb)
    y = y + b3_ref[...]

    # In-kernel transpose of the small result (hidden under the output DMA),
    # then a batch-major, row-contiguous store — no wrapper-side HBM pass.
    o_ref[...] = y.T.astype(o_ref.dtype)                          # (Tb, O)


def decoder_forward(z, w1, b1, w2, b2, w3, b3, *, tile_b=16384,
                    vmem_limit_bytes=32 * 1024 * 1024):
    """z: (B, latent).  w*: PyTorch layout (out, in).  b*: (out,)."""
    B, latent_dim = z.shape
    out_dim = w3.shape[0]

    # Balance the batch over grid steps: tile_b is a multiple of 8 (sublane),
    # as large as possible (<= requested tile_b) with minimal padding.  Large
    # tiles amortize the ~0.35 us/step grid overhead; balanced steps keep both
    # v7x TensorCores busy via dimension_semantics=("parallel",).
    num_tiles = pl.cdiv(B, tile_b)
    tile_b = _round_up(pl.cdiv(B, num_tiles), 8)
    Bp = num_tiles * tile_b

    z_in = z if Bp == B else jnp.pad(z, ((0, Bp - B), (0, 0)))

    b1c = b1.reshape(-1, 1)                  # (8, 1)
    b2c = b2.reshape(-1, 1)                  # (16, 1)
    b3c = b3.reshape(-1, 1)                  # (out_dim, 1)

    flops = 2 * Bp * (latent_dim * 8 + 8 * 16 + 16 * out_dim)
    bytes_accessed = 4 * (
        Bp * latent_dim + Bp * out_dim
        + w1.size + w2.size + w3.size + b1.size + b2.size + b3.size)

    resident = lambda i: (0, 0)              # weights / biases: same block every step
    batched = lambda i: (i, 0)               # z / out: tiled along the batch axis

    out = pl.pallas_call(
        decoder_kernel,
        out_shape=jax.ShapeDtypeStruct((Bp, out_dim), jnp.float32),
        grid=(num_tiles,),
        in_specs=[
            pl.BlockSpec((tile_b, latent_dim), batched),   # z (batch-major)
            pl.BlockSpec((8, latent_dim), resident),       # W1
            pl.BlockSpec((8, 1), resident),                # b1
            pl.BlockSpec((16, 8), resident),               # W2
            pl.BlockSpec((16, 1), resident),               # b2
            pl.BlockSpec((out_dim, 16), resident),         # W3
            pl.BlockSpec((out_dim, 1), resident),          # b3
        ],
        out_specs=pl.BlockSpec((tile_b, out_dim), batched),
        compiler_params=pltpu.CompilerParams(
            dimension_semantics=("parallel",),
            vmem_limit_bytes=vmem_limit_bytes,
        ),
        cost_estimate=pl.CostEstimate(
            flops=flops, transcendentals=0, bytes_accessed=bytes_accessed),
    )(z_in, w1, b1c, w2, b2c, w3, b3c)

    return out if Bp == B else out[:B]


def init_params(key, latent_dim, output_dim):
    """Deterministic synthetic parameters in PyTorch nn.Linear layout."""
    ks = jax.random.split(key, 6)
    w1 = jax.random.normal(ks[0], (8, latent_dim), jnp.float32) * 0.1
    b1 = jax.random.normal(ks[1], (8,), jnp.float32) * 0.1
    w2 = jax.random.normal(ks[2], (16, 8), jnp.float32) * 0.1
    b2 = jax.random.normal(ks[3], (16,), jnp.float32) * 0.1
    w3 = jax.random.normal(ks[4], (output_dim, 16), jnp.float32) * 0.1
    b3 = jax.random.normal(ks[5], (output_dim,), jnp.float32) * 0.1
    return w1, b1, w2, b2, w3, b3


def reference_forward(z, w1, b1, w2, b2, w3, b3):
    hp = lax.Precision.HIGHEST
    h = jnp.maximum(jnp.dot(z, w1.T, precision=hp) + b1, 0.0)
    h = jnp.maximum(jnp.dot(h, w2.T, precision=hp) + b2, 0.0)
    return jnp.dot(h, w3.T, precision=hp) + b3


if __name__ == "__main__":
    latent_dim = 4
    output_dim = 32
    batch = 8

    key = jax.random.PRNGKey(0)
    k_z, k_p = jax.random.split(key)
    z = jax.random.normal(k_z, (batch, latent_dim), jnp.float32)
    params = init_params(k_p, latent_dim, output_dim)

    out = decoder_forward(z, *params)
    out = jax.block_until_ready(out)

    ref = reference_forward(z, *params)
    assert out.shape == (batch, output_dim)
    assert jnp.allclose(out, ref, atol=1e-4, rtol=1e-4), "mismatch vs reference"

    print("KERNEL_OK")
</pallas_src>

<mosaic_0001>
module attributes {stable_mosaic.version = 11 : i64} {
  func.func @decoder_kernel(%arg0: i32, %arg1: memref<8x4xf32, #tpu.memory_space<vmem>>, %arg2: memref<8x4xf32, #tpu.memory_space<vmem>>, %arg3: memref<8x1xf32, #tpu.memory_space<vmem>>, %arg4: memref<16x8xf32, #tpu.memory_space<vmem>>, %arg5: memref<16x1xf32, #tpu.memory_space<vmem>>, %arg6: memref<32x16xf32, #tpu.memory_space<vmem>>, %arg7: memref<32x1xf32, #tpu.memory_space<vmem>>, %arg8: memref<8x32xf32, #tpu.memory_space<vmem>>) attributes {dimension_semantics = [#tpu.dimension_semantics<parallel>], iteration_bounds = array<i64: 1>, scalar_prefetch = 0 : i64, scratch_operands = 0 : i64, tpu.core_type = #tpu.core_type<tc>, window_params = [{transform_indices = @transform_0, window_bounds = array<i64: 8, 4>}, {pipeline_mode = #tpu.pipeline_mode<synchronous>, transform_indices = @transform_1, window_bounds = array<i64: 8, 4>}, {pipeline_mode = #tpu.pipeline_mode<synchronous>, transform_indices = @transform_2, window_bounds = array<i64: 8, 1>}, {pipeline_mode = #tpu.pipeline_mode<synchronous>, transform_indices = @transform_3, window_bounds = array<i64: 16, 8>}, {pipeline_mode = #tpu.pipeline_mode<synchronous>, transform_indices = @transform_4, window_bounds = array<i64: 16, 1>}, {pipeline_mode = #tpu.pipeline_mode<synchronous>, transform_indices = @transform_5, window_bounds = array<i64: 32, 16>}, {pipeline_mode = #tpu.pipeline_mode<synchronous>, transform_indices = @transform_6, window_bounds = array<i64: 32, 1>}, {transform_indices = @transform_7, window_bounds = array<i64: 8, 32>}]} {
    %c0 = arith.constant 0 : index
    %c0_0 = arith.constant 0 : index
    %0 = vector.load %arg1[%c0, %c0_0] : memref<8x4xf32, #tpu.memory_space<vmem>>, vector<8x4xf32>
    %c0_1 = arith.constant 0 : index
    %c0_2 = arith.constant 0 : index
    %1 = vector.load %arg2[%c0_1, %c0_2] : memref<8x4xf32, #tpu.memory_space<vmem>>, vector<8x4xf32>
    %cst = arith.constant dense<0.000000e+00> : vector<8x8xf32>
    %2 = tpu.matmul %1, %0, %cst {dimension_numbers = #tpu.dot_dimension_numbers<[1], [1], [0], [0], [0, 0, 1, 0], [], []>, precision = #tpu.contract_precision<fp32>} : vector<8x4xf32>, vector<8x4xf32>, vector<8x8xf32> -> vector<8x8xf32>
    %c0_3 = arith.constant 0 : index
    %c0_4 = arith.constant 0 : index
    %3 = vector.load %arg3[%c0_3, %c0_4] : memref<8x1xf32, #tpu.memory_space<vmem>>, vector<8x1xf32>
    %4 = vector.broadcast %3 : vector<8x1xf32> to vector<8x8xf32>
    %5 = arith.addf %2, %4 : vector<8x8xf32>
    %cst_5 = arith.constant 0.000000e+00 : f32
    %6 = vector.broadcast %cst_5 : f32 to vector<8x8xf32>
    %7 = arith.maximumf %5, %6 : vector<8x8xf32>
    %c0_6 = arith.constant 0 : index
    %c0_7 = arith.constant 0 : index
    %8 = vector.load %arg4[%c0_6, %c0_7] : memref<16x8xf32, #tpu.memory_space<vmem>>, vector<16x8xf32>
    %cst_8 = arith.constant dense<0.000000e+00> : vector<16x8xf32>
    %9 = tpu.matmul %8, %7, %cst_8 {dimension_numbers = #tpu.dot_dimension_numbers<[1], [0], [0], [1], [0, 0, 1, 1], [], []>, precision = #tpu.contract_precision<fp32>} : vector<16x8xf32>, vector<8x8xf32>, vector<16x8xf32> -> vector<16x8xf32>
    %c0_9 = arith.constant 0 : index
    %c0_10 = arith.constant 0 : index
    %10 = vector.load %arg5[%c0_9, %c0_10] : memref<16x1xf32, #tpu.memory_space<vmem>>, vector<16x1xf32>
    %11 = vector.broadcast %10 : vector<16x1xf32> to vector<16x8xf32>
    %12 = arith.addf %9, %11 : vector<16x8xf32>
    %cst_11 = arith.constant 0.000000e+00 : f32
    %13 = vector.broadcast %cst_11 : f32 to vector<16x8xf32>
    %14 = arith.maximumf %12, %13 : vector<16x8xf32>
    %c0_12 = arith.constant 0 : index
    %c0_13 = arith.constant 0 : index
    %15 = vector.load %arg6[%c0_12, %c0_13] : memref<32x16xf32, #tpu.memory_space<vmem>>, vector<32x16xf32>
    %cst_14 = arith.constant dense<0.000000e+00> : vector<32x8xf32>
    %16 = tpu.matmul %15, %14, %cst_14 {dimension_numbers = #tpu.dot_dimension_numbers<[1], [0], [0], [1], [0, 0, 1, 1], [], []>, precision = #tpu.contract_precision<fp32>} : vector<32x16xf32>, vector<16x8xf32>, vector<32x8xf32> -> vector<32x8xf32>
    %c0_15 = arith.constant 0 : index
    %c0_16 = arith.constant 0 : index
    %17 = vector.load %arg7[%c0_15, %c0_16] : memref<32x1xf32, #tpu.memory_space<vmem>>, vector<32x1xf32>
    %18 = vector.broadcast %17 : vector<32x1xf32> to vector<32x8xf32>
    %19 = arith.addf %16, %18 : vector<32x8xf32>
    %20 = tpu.transpose %19, [1, 0] : vector<32x8xf32> -> vector<8x32xf32>
    %c0_17 = arith.constant 0 : index
    %c0_18 = arith.constant 0 : index
    %21 = vector.load %arg8[%c0_17, %c0_18] : memref<8x32xf32, #tpu.memory_space<vmem>>, vector<8x32xf32>
    tpu.vector_store %arg8[%c0_17, %c0_18], %20 {strides = array<i32>} : memref<8x32xf32, #tpu.memory_space<vmem>>, vector<8x32xf32>,
    return
  }
  func.func @transform_0(%arg0: i32) -> (i32, i32) {
    %c0_i32 = arith.constant 0 : i32
    %c0_i32_0 = arith.constant 0 : i32
    return %arg0, %c0_i32 : i32, i32
  }
  func.func @transform_1(%arg0: i32) -> (i32, i32) {
    %c0_i32 = arith.constant 0 : i32
    %c0_i32_0 = arith.constant 0 : i32
    %c0_i32_1 = arith.constant 0 : i32
    return %c0_i32, %c0_i32_0 : i32, i32
  }
  func.func @transform_2(%arg0: i32) -> (i32, i32) {
    %c0_i32 = arith.constant 0 : i32
    %c0_i32_0 = arith.constant 0 : i32
    %c0_i32_1 = arith.constant 0 : i32
    return %c0_i32, %c0_i32_0 : i32, i32
  }
  func.func @transform_3(%arg0: i32) -> (i32, i32) {
    %c0_i32 = arith.constant 0 : i32
    %c0_i32_0 = arith.constant 0 : i32
    %c0_i32_1 = arith.constant 0 : i32
    return %c0_i32, %c0_i32_0 : i32, i32
  }
  func.func @transform_4(%arg0: i32) -> (i32, i32) {
    %c0_i32 = arith.constant 0 : i32
    %c0_i32_0 = arith.constant 0 : i32
    %c0_i32_1 = arith.constant 0 : i32
    return %c0_i32, %c0_i32_0 : i32, i32
  }
  func.func @transform_5(%arg0: i32) -> (i32, i32) {
    %c0_i32 = arith.constant 0 : i32
    %c0_i32_0 = arith.constant 0 : i32
    %c0_i32_1 = arith.constant 0 : i32
    return %c0_i32, %c0_i32_0 : i32, i32
  }
  func.func @transform_6(%arg0: i32) -> (i32, i32) {
    %c0_i32 = arith.constant 0 : i32
    %c0_i32_0 = arith.constant 0 : i32
    %c0_i32_1 = arith.constant 0 : i32
    return %c0_i32, %c0_i32_0 : i32, i32
  }
  func.func @transform_7(%arg0: i32) -> (i32, i32) {
    %c0_i32 = arith.constant 0 : i32
    %c0_i32_0 = arith.constant 0 : i32
    return %arg0, %c0_i32 : i32, i32
  }
}

</mosaic_0001>

<llo_original>
// kernel: tpu_custom_call.1
$region0: #{tpu_custom_call.1}
  #allocation0 [shape = 'u32[]', space=smem, size = 0x4, offset = 0x4, fixed_abs, tag = 'smem constant byte address 0x4 - core index']
  #allocation1 [shape = 'u32[72,128]{1,0:T(1,128)}', space=vmem, size = 0x9000, scoped, tag = 'internal scratch']
  %s0 = inlined_call_operand.vmem [shape: f32[8,4], index: 0, kind: input, shape index: {}]
  %s1 = inlined_call_operand.vmem [shape: f32[8,4], index: 1, kind: input, shape index: {}]
  %s2 = inlined_call_operand.vmem [shape: f32[8,1], index: 2, kind: input, shape index: {}]
  %s3 = inlined_call_operand.vmem [shape: f32[16,8], index: 3, kind: input, shape index: {}]
  %s4 = inlined_call_operand.vmem [shape: f32[16,1], index: 4, kind: input, shape index: {}]
  %s5 = inlined_call_operand.vmem [shape: f32[32,16], index: 5, kind: input, shape index: {}]
  %s6 = inlined_call_operand.vmem [shape: f32[32,1], index: 6, kind: input, shape index: {}]
  %s7 = inlined_call_operand.hbm [shape: f32[8,32], index: 7, kind: output, shape index: {}]
  %s8 = sld [smem:[#allocation0]]
  $region38: #{tpu_custom_call.1} parent=0
    _
  %s10 = ssub.s32 1, %s8
  %s11 = scalar_select 0, %s10, %s8
  $region1: #{tpu_custom_call.1} parent=0
    #allocation2 [shape = 'u8[4096]{0}', space=vmem, size = 0x1000, scoped, tag = 'output window, operand 0, single buffered']
    #allocation3 [shape = 's32[1]{0}', space=sflag, size = 0x4, scoped, tag = 'scoped memory for tpu_custom_call.1']
    %12 = vsyncpa [#allocation3], 0
    // Predicated region
    $region2: #{tpu_custom_call.1} parent=1 // pred_check
      _
    $region3: #{tpu_custom_call.1} parent=1 // pred_check_branch
      %14 = sbr.rel (0) target = $region5
    $region4: #{tpu_custom_call.1} parent=1 // pred_region
      _
    $region5: #{tpu_custom_call.1} parent=1 // pred_fallthru
      _
    // Predicated region
    $region6: #{tpu_custom_call.1} parent=1 // pred_check
      _
    $region7: #{tpu_custom_call.1} parent=1 // pred_check_branch
      %16 = sbr.rel (0) target = $region9
    $region8: #{tpu_custom_call.1} parent=1 // pred_region
      _
    $region9: #{tpu_custom_call.1} parent=1 // pred_fallthru
      _
    // Predicated region
    $region10: #{tpu_custom_call.1} parent=1 // pred_check
      _
    $region11: #{tpu_custom_call.1} parent=1 // pred_check_branch
      %18 = sbr.rel (0) target = $region13
    $region12: #{tpu_custom_call.1} parent=1 // pred_region
      _
    $region13: #{tpu_custom_call.1} parent=1 // pred_fallthru
      _
    // Predicated region
    $region14: #{tpu_custom_call.1} parent=1 // pred_check
      _
    $region15: #{tpu_custom_call.1} parent=1 // pred_check_branch
      %20 = sbr.rel (0) target = $region17
    $region16: #{tpu_custom_call.1} parent=1 // pred_region
      _
    $region17: #{tpu_custom_call.1} parent=1 // pred_fallthru
      _
    // Predicated region
    $region18: #{tpu_custom_call.1} parent=1 // pred_check
      _
    $region19: #{tpu_custom_call.1} parent=1 // pred_check_branch
      %22 = sbr.rel (0) target = $region21
    $region20: #{tpu_custom_call.1} parent=1 // pred_region
      _
    $region21: #{tpu_custom_call.1} parent=1 // pred_fallthru
      _
    // Predicated region
    $region22: #{tpu_custom_call.1} parent=1 // pred_check
      _
    $region23: #{tpu_custom_call.1} parent=1 // pred_check_branch
      %24 = sbr.rel (0) target = $region25
    $region24: #{tpu_custom_call.1} parent=1 // pred_region
      _
    $region25: #{tpu_custom_call.1} parent=1 // pred_fallthru
      _
    // Predicated region
    $region26: #{tpu_custom_call.1} parent=1 // pred_check
      _
    $region27: #{tpu_custom_call.1} parent=1 // pred_check_branch
      %26 = sbr.rel (0) target = $region29
    $region28: #{tpu_custom_call.1} parent=1 // pred_region
      _
    $region29: #{tpu_custom_call.1} parent=1 // pred_fallthru
      _
    %v27 = vld [vmem:[%s0] sm:$0xff]
    %v28 = vld [vmem:[%s1] sm:$0xff]
    %v29 = vld [vmem:[%s2] sm:$0xff]
    %31 = vset.pattern.permute.xlu0 0
    %32 = vperm.xlu0 %31, %v29
    %v33 = vpop.permute.xlu0 %32
    %vm35 = vcmask 31744
    %v37 = vsel %vm35, %v28, 0
    %v40 = vsel %vm35, %v27, 0
    %42 = vmatpush.xpose.msra.mxu0 0.0
    %43 = vmatpush.xpose.msra.mxu0 0.0
    %44 = vmatpush.xpose.msra.mxu0 0.0
    %45 = vmatpush.xpose.msra.mxu0 0.0
    %46 = vmatpush.xpose.msra.mxu0 0.0
    %47 = vmatpush.xpose.msra.mxu0 0.0
    %48 = vmatpush.xpose.msra.mxu0 0.0
    %49 = vmatpush.xpose.msra.mxu0 0.0
    %50 = vmatpush.xpose.msra.mxu0 0.0
    %51 = vmatpush.xpose.msra.mxu0 0.0
    %52 = vmatpush.xpose.msra.mxu0 0.0
    %53 = vmatpush.xpose.msra.mxu0 0.0
    %54 = vmatpush.xpose.msra.mxu0 0.0
    %55 = vmatpush.xpose.msra.mxu0 0.0
    %56 = vmatpush.xpose.msra.mxu0 0.0
    %v57 = vand.u32 %v40, 4294901760
    %58 = vmatpush.xpose.msra.mxu0 %v57
    %v59 = vand.u32 %v37, 4294901760
    %v60 = vsub.f32 %v37, %v59
    %v61 = vand.u32 %v60, 4294901760
    %v62 = vsub.f32 %v60, %v61
    %v63 = vand.u32 %v62, 4294901760
    %64 = vmatmul.f32.gmra.mxu0 %v63
    %v65 = vpop.f32.mrf.mxu0
    %v66 = vadd.f32 %v33, %v65
    %67 = vdwg.mxu0
    %68 = vmatpush.xpose.msra.mxu0 0.0
    %69 = vmatpush.xpose.msra.mxu0 0.0
    %70 = vmatpush.xpose.msra.mxu0 0.0
    %71 = vmatpush.xpose.msra.mxu0 0.0
    %72 = vmatpush.xpose.msra.mxu0 0.0
    %73 = vmatpush.xpose.msra.mxu0 0.0
    %74 = vmatpush.xpose.msra.mxu0 0.0
    %75 = vmatpush.xpose.msra.mxu0 0.0
    %76 = vmatpush.xpose.msra.mxu0 0.0
    %77 = vmatpush.xpose.msra.mxu0 0.0
    %78 = vmatpush.xpose.msra.mxu0 0.0
    %79 = vmatpush.xpose.msra.mxu0 0.0
    %80 = vmatpush.xpose.msra.mxu0 0.0
    %81 = vmatpush.xpose.msra.mxu0 0.0
    %82 = vmatpush.xpose.msra.mxu0 0.0
    %v83 = vand.u32 %v40, 4294901760
    %v84 = vsub.f32 %v40, %v83
    %v85 = vand.u32 %v84, 4294901760
    %v86 = vsub.f32 %v84, %v85
    %v87 = vand.u32 %v86, 4294901760
    %88 = vmatpush.xpose.msra.mxu0 %v87
    %v89 = vand.u32 %v37, 4294901760
    %90 = vmatmul.f32.gmra.mxu0 %v89
    %v91 = vpop.f32.mrf.mxu0
    %v92 = vadd.f32 %v66, %v91
    %93 = vdwg.mxu0
    %94 = vmatpush.xpose.msra.mxu0 0.0
    %95 = vmatpush.xpose.msra.mxu0 0.0
    %96 = vmatpush.xpose.msra.mxu0 0.0
    %97 = vmatpush.xpose.msra.mxu0 0.0
    %98 = vmatpush.xpose.msra.mxu0 0.0
    %99 = vmatpush.xpose.msra.mxu0 0.0
    %100 = vmatpush.xpose.msra.mxu0 0.0
    %101 = vmatpush.xpose.msra.mxu0 0.0
    %102 = vmatpush.xpose.msra.mxu0 0.0
    %103 = vmatpush.xpose.msra.mxu0 0.0
    %104 = vmatpush.xpose.msra.mxu0 0.0
    %105 = vmatpush.xpose.msra.mxu0 0.0
    %106 = vmatpush.xpose.msra.mxu0 0.0
    %107 = vmatpush.xpose.msra.mxu0 0.0
    %108 = vmatpush.xpose.msra.mxu0 0.0
    %v109 = vand.u32 %v40, 4294901760
    %v110 = vsub.f32 %v40, %v109
    %111 = vmatpush.xpose.msra.mxu0 %v110
    %v112 = vand.u32 %v37, 4294901760
    %v113 = vsub.f32 %v37, %v112
    %114 = vmatmul.f32.gmra.mxu0 %v113
    %v115 = vpop.f32.mrf.mxu0
    %v116 = vadd.f32 %v92, %v115
    %117 = vdwg.mxu0
    %118 = vmatpush.xpose.msra.mxu0 0.0
    %119 = vmatpush.xpose.msra.mxu0 0.0
    %120 = vmatpush.xpose.msra.mxu0 0.0
    %121 = vmatpush.xpose.msra.mxu0 0.0
    %122 = vmatpush.xpose.msra.mxu0 0.0
    %123 = vmatpush.xpose.msra.mxu0 0.0
    %124 = vmatpush.xpose.msra.mxu0 0.0
    %125 = vmatpush.xpose.msra.mxu0 0.0
    %126 = vmatpush.xpose.msra.mxu0 0.0
    %127 = vmatpush.xpose.msra.mxu0 0.0
    %128 = vmatpush.xpose.msra.mxu0 0.0
    %129 = vmatpush.xpose.msra.mxu0 0.0
    %130 = vmatpush.xpose.msra.mxu0 0.0
    %131 = vmatpush.xpose.msra.mxu0 0.0
    %132 = vmatpush.xpose.msra.mxu0 0.0
    %v133 = vand.u32 %v40, 4294901760
    %134 = vmatpush.xpose.msra.mxu0 %v133
    %v135 = vand.u32 %v37, 4294901760
    %v136 = vsub.f32 %v37, %v135
    %v137 = vand.u32 %v136, 4294901760
    %138 = vmatmul.f32.gmra.mxu0 %v137
    %v139 = vpop.f32.mrf.mxu0
    %v140 = vadd.f32 %v116, %v139
    %141 = vdwg.mxu0
    %142 = vmatpush.xpose.msra.mxu0 0.0
    %143 = vmatpush.xpose.msra.mxu0 0.0
    %144 = vmatpush.xpose.msra.mxu0 0.0
    %145 = vmatpush.xpose.msra.mxu0 0.0
    %146 = vmatpush.xpose.msra.mxu0 0.0
    %147 = vmatpush.xpose.msra.mxu0 0.0
    %148 = vmatpush.xpose.msra.mxu0 0.0
    %149 = vmatpush.xpose.msra.mxu0 0.0
    %150 = vmatpush.xpose.msra.mxu0 0.0
    %151 = vmatpush.xpose.msra.mxu0 0.0
    %152 = vmatpush.xpose.msra.mxu0 0.0
    %153 = vmatpush.xpose.msra.mxu0 0.0
    %154 = vmatpush.xpose.msra.mxu0 0.0
    %155 = vmatpush.xpose.msra.mxu0 0.0
    %156 = vmatpush.xpose.msra.mxu0 0.0
    %v157 = vand.u32 %v40, 4294901760
    %v158 = vsub.f32 %v40, %v157
    %v159 = vand.u32 %v158, 4294901760
    %160 = vmatpush.xpose.msra.mxu0 %v159
    %v161 = vand.u32 %v37, 4294901760
    %162 = vmatmul.f32.gmra.mxu0 %v161
    %v163 = vpop.f32.mrf.mxu0
    %v164 = vadd.f32 %v140, %v163
    %165 = vdwg.mxu0
    %166 = vmatpush.xpose.msra.mxu0 0.0
    %167 = vmatpush.xpose.msra.mxu0 0.0
    %168 = vmatpush.xpose.msra.mxu0 0.0
    %169 = vmatpush.xpose.msra.mxu0 0.0
    %170 = vmatpush.xpose.msra.mxu0 0.0
    %171 = vmatpush.xpose.msra.mxu0 0.0
    %172 = vmatpush.xpose.msra.mxu0 0.0
    %173 = vmatpush.xpose.msra.mxu0 0.0
    %174 = vmatpush.xpose.msra.mxu0 0.0
    %175 = vmatpush.xpose.msra.mxu0 0.0
    %176 = vmatpush.xpose.msra.mxu0 0.0
    %177 = vmatpush.xpose.msra.mxu0 0.0
    %178 = vmatpush.xpose.msra.mxu0 0.0
    %179 = vmatpush.xpose.msra.mxu0 0.0
    %180 = vmatpush.xpose.msra.mxu0 0.0
    %v181 = vand.u32 %v40, 4294901760
    %182 = vmatpush.xpose.msra.mxu0 %v181
    %v183 = vand.u32 %v37, 4294901760
    %184 = vmatmul.f32.gmra.mxu0 %v183
    %v185 = vpop.f32.mrf.mxu0
    %v186 = vadd.f32 %v164, %v185
    %187 = vdwg.mxu0
    %v188 = vmax.f32 %v186, 0.0
    %v189 = vld [vmem:[%s3] sm:$0xff]
    %v190 = vld [vmem:[%s3 + $0x8] sm:$0xff]
    %v191 = vld [vmem:[%s4] sm:$0xff]
    %v192 = vld [vmem:[%s4 + $0x8] sm:$0xff]
    %194 = vset.pattern.permute.xlu0 0
    %195 = vperm.xlu0 %194, %v191
    %v196 = vpop.permute.xlu0 %195
    %199 = vset.pattern.permute.xlu0 0
    %200 = vperm.xlu0 %199, %v192
    %v201 = vpop.permute.xlu0 %200
    %vm203 = vcmask 64512
    %v205 = vsel %vm203, %v189, 0
    %v208 = vsel %vm203, %v190, 0
    %210 = vmatpush.msra.mxu0 0.0
    %211 = vmatpush.msra.mxu0 0.0
    %212 = vmatpush.msra.mxu0 0.0
    %213 = vmatpush.msra.mxu0 0.0
    %214 = vmatpush.msra.mxu0 0.0
    %215 = vmatpush.msra.mxu0 0.0
    %216 = vmatpush.msra.mxu0 0.0
    %217 = vmatpush.msra.mxu0 0.0
    %218 = vmatpush.msra.mxu0 0.0
    %219 = vmatpush.msra.mxu0 0.0
    %220 = vmatpush.msra.mxu0 0.0
    %221 = vmatpush.msra.mxu0 0.0
    %222 = vmatpush.msra.mxu0 0.0
    %223 = vmatpush.msra.mxu0 0.0
    %224 = vmatpush.msra.mxu0 0.0
    %v225 = vand.u32 %v188, 4294901760
    %226 = vmatpush.msra.mxu0 %v225
    %v227 = vand.u32 %v205, 4294901760
    %v228 = vsub.f32 %v205, %v227
    %v229 = vand.u32 %v228, 4294901760
    %v230 = vsub.f32 %v228, %v229
    %v231 = vand.u32 %v230, 4294901760
    %232 = vmatmul.f32.gmra.mxu0 %v231
    %v233 = vpop.f32.mrf.mxu0
    %v234 = vadd.f32 %v196, %v233
    %v235 = vand.u32 %v208, 4294901760
    %v236 = vsub.f32 %v208, %v235
    %v237 = vand.u32 %v236, 4294901760
    %v238 = vsub.f32 %v236, %v237
    %v239 = vand.u32 %v238, 4294901760
    %240 = vmatmul.f32.gmra.mxu0 %v239
    %v241 = vpop.f32.mrf.mxu0
    %v242 = vadd.f32 %v201, %v241
    %243 = vdwg.mxu0
    %244 = vmatpush.msra.mxu0 0.0
    %245 = vmatpush.msra.mxu0 0.0
    %246 = vmatpush.msra.mxu0 0.0
    %247 = vmatpush.msra.mxu0 0.0
    %248 = vmatpush.msra.mxu0 0.0
    %249 = vmatpush.msra.mxu0 0.0
    %250 = vmatpush.msra.mxu0 0.0
    %251 = vmatpush.msra.mxu0 0.0
    %252 = vmatpush.msra.mxu0 0.0
    %253 = vmatpush.msra.mxu0 0.0
    %254 = vmatpush.msra.mxu0 0.0
    %255 = vmatpush.msra.mxu0 0.0
    %256 = vmatpush.msra.mxu0 0.0
    %257 = vmatpush.msra.mxu0 0.0
    %258 = vmatpush.msra.mxu0 0.0
    %v259 = vand.u32 %v188, 4294901760
    %v260 = vsub.f32 %v188, %v259
    %v261 = vand.u32 %v260, 4294901760
    %v262 = vsub.f32 %v260, %v261
    %v263 = vand.u32 %v262, 4294901760
    %264 = vmatpush.msra.mxu0 %v263
    %v265 = vand.u32 %v205, 4294901760
    %266 = vmatmul.f32.gmra.mxu0 %v265
    %v267 = vpop.f32.mrf.mxu0
    %v268 = vadd.f32 %v234, %v267
    %v269 = vand.u32 %v208, 4294901760
    %270 = vmatmul.f32.gmra.mxu0 %v269
    %v271 = vpop.f32.mrf.mxu0
    %v272 = vadd.f32 %v242, %v271
    %273 = vdwg.mxu0
    %274 = vmatpush.msra.mxu0 0.0
    %275 = vmatpush.msra.mxu0 0.0
    %276 = vmatpush.msra.mxu0 0.0
    %277 = vmatpush.msra.mxu0 0.0
    %278 = vmatpush.msra.mxu0 0.0
    %279 = vmatpush.msra.mxu0 0.0
    %280 = vmatpush.msra.mxu0 0.0
    %281 = vmatpush.msra.mxu0 0.0
    %282 = vmatpush.msra.mxu0 0.0
    %283 = vmatpush.msra.mxu0 0.0
    %284 = vmatpush.msra.mxu0 0.0
    %285 = vmatpush.msra.mxu0 0.0
    %286 = vmatpush.msra.mxu0 0.0
    %287 = vmatpush.msra.mxu0 0.0
    %288 = vmatpush.msra.mxu0 0.0
    %v289 = vand.u32 %v188, 4294901760
    %v290 = vsub.f32 %v188, %v289
    %291 = vmatpush.msra.mxu0 %v290
    %v292 = vand.u32 %v205, 4294901760
    %v293 = vsub.f32 %v205, %v292
    %294 = vmatmul.f32.gmra.mxu0 %v293
    %v295 = vpop.f32.mrf.mxu0
    %v296 = vadd.f32 %v268, %v295
    %v297 = vand.u32 %v208, 4294901760
    %v298 = vsub.f32 %v208, %v297
    %299 = vmatmul.f32.gmra.mxu0 %v298
    %v300 = vpop.f32.mrf.mxu0
    %v301 = vadd.f32 %v272, %v300
    %302 = vdwg.mxu0
    %303 = vmatpush.msra.mxu0 0.0
    %304 = vmatpush.msra.mxu0 0.0
    %305 = vmatpush.msra.mxu0 0.0
    %306 = vmatpush.msra.mxu0 0.0
    %307 = vmatpush.msra.mxu0 0.0
    %308 = vmatpush.msra.mxu0 0.0
    %309 = vmatpush.msra.mxu0 0.0
    %310 = vmatpush.msra.mxu0 0.0
    %311 = vmatpush.msra.mxu0 0.0
    %312 = vmatpush.msra.mxu0 0.0
    %313 = vmatpush.msra.mxu0 0.0
    %314 = vmatpush.msra.mxu0 0.0
    %315 = vmatpush.msra.mxu0 0.0
    %316 = vmatpush.msra.mxu0 0.0
    %317 = vmatpush.msra.mxu0 0.0
    %v318 = vand.u32 %v188, 4294901760
    %319 = vmatpush.msra.mxu0 %v318
    %v320 = vand.u32 %v205, 4294901760
    %v321 = vsub.f32 %v205, %v320
    %v322 = vand.u32 %v321, 4294901760
    %323 = vmatmul.f32.gmra.mxu0 %v322
    %v324 = vpop.f32.mrf.mxu0
    %v325 = vadd.f32 %v296, %v324
    %v326 = vand.u32 %v208, 4294901760
    %v327 = vsub.f32 %v208, %v326
    %v328 = vand.u32 %v327, 4294901760
    %329 = vmatmul.f32.gmra.mxu0 %v328
    %v330 = vpop.f32.mrf.mxu0
    %v331 = vadd.f32 %v301, %v330
    %332 = vdwg.mxu0
    %333 = vmatpush.msra.mxu0 0.0
    %334 = vmatpush.msra.mxu0 0.0
    %335 = vmatpush.msra.mxu0 0.0
    %336 = vmatpush.msra.mxu0 0.0
    %337 = vmatpush.msra.mxu0 0.0
    %338 = vmatpush.msra.mxu0 0.0
    %339 = vmatpush.msra.mxu0 0.0
    %340 = vmatpush.msra.mxu0 0.0
    %341 = vmatpush.msra.mxu0 0.0
    %342 = vmatpush.msra.mxu0 0.0
    %343 = vmatpush.msra.mxu0 0.0
    %344 = vmatpush.msra.mxu0 0.0
    %345 = vmatpush.msra.mxu0 0.0
    %346 = vmatpush.msra.mxu0 0.0
    %347 = vmatpush.msra.mxu0 0.0
    %v348 = vand.u32 %v188, 4294901760
    %v349 = vsub.f32 %v188, %v348
    %v350 = vand.u32 %v349, 4294901760
    %351 = vmatpush.msra.mxu0 %v350
    %v352 = vand.u32 %v205, 4294901760
    %353 = vmatmul.f32.gmra.mxu0 %v352
    %v354 = vpop.f32.mrf.mxu0
    %v355 = vadd.f32 %v325, %v354
    %v356 = vand.u32 %v208, 4294901760
    %357 = vmatmul.f32.gmra.mxu0 %v356
    %v358 = vpop.f32.mrf.mxu0
    %v359 = vadd.f32 %v331, %v358
    %360 = vdwg.mxu0
    %361 = vmatpush.msra.mxu0 0.0
    %362 = vmatpush.msra.mxu0 0.0
    %363 = vmatpush.msra.mxu0 0.0
    %364 = vmatpush.msra.mxu0 0.0
    %365 = vmatpush.msra.mxu0 0.0
    %366 = vmatpush.msra.mxu0 0.0
    %367 = vmatpush.msra.mxu0 0.0
    %368 = vmatpush.msra.mxu0 0.0
    %369 = vmatpush.msra.mxu0 0.0
    %370 = vmatpush.msra.mxu0 0.0
    %371 = vmatpush.msra.mxu0 0.0
    %372 = vmatpush.msra.mxu0 0.0
    %373 = vmatpush.msra.mxu0 0.0
    %374 = vmatpush.msra.mxu0 0.0
    %375 = vmatpush.msra.mxu0 0.0
    %v376 = vand.u32 %v188, 4294901760
    %377 = vmatpush.msra.mxu0 %v376
    %v378 = vand.u32 %v205, 4294901760
    %379 = vmatmul.f32.gmra.mxu0 %v378
    %v380 = vpop.f32.mrf.mxu0
    %v381 = vadd.f32 %v355, %v380
    %v382 = vand.u32 %v208, 4294901760
    %383 = vmatmul.f32.gmra.mxu0 %v382
    %v384 = vpop.f32.mrf.mxu0
    %v385 = vadd.f32 %v359, %v384
    %386 = vdwg.mxu0
    %v387 = vmax.f32 %v381, 0.0
    %v388 = vmax.f32 %v385, 0.0
    %v389 = vld [vmem:[%s5] sm:$0xff]
    %v390 = vld [vmem:[%s5 + $0x8] sm:$0xff]
    %v391 = vld [vmem:[%s5 + $0x10] sm:$0xff]
    %v392 = vld [vmem:[%s5 + $0x18] sm:$0xff]
    %v393 = vld [vmem:[%s6] sm:$0xff]
    %v394 = vld [vmem:[%s6 + $0x8] sm:$0xff]
    %v395 = vld [vmem:[%s6 + $0x10] sm:$0xff]
    %v396 = vld [vmem:[%s6 + $0x18] sm:$0xff]
    %398 = vset.pattern.permute.xlu0 0
    %399 = vperm.xlu0 %398, %v393
    %v400 = vpop.permute.xlu0 %399
    %403 = vset.pattern.permute.xlu0 0
    %404 = vperm.xlu0 %403, %v394
    %v405 = vpop.permute.xlu0 %404
    %408 = vset.pattern.permute.xlu0 0
    %409 = vperm.xlu0 %408, %v395
    %v410 = vpop.permute.xlu0 %409
    %413 = vset.pattern.permute.xlu0 0
    %414 = vperm.xlu0 %413, %v396
    %v415 = vpop.permute.xlu0 %414
    %vm417 = vcmask 130048
    %v419 = vsel %vm417, %v389, 0
    %v422 = vsel %vm417, %v390, 0
    %v425 = vsel %vm417, %v391, 0
    %v428 = vsel %vm417, %v392, 0
    %430 = vmatpush.msra.mxu0 0.0
    %431 = vmatpush.msra.mxu0 0.0
    %432 = vmatpush.msra.mxu0 0.0
    %433 = vmatpush.msra.mxu0 0.0
    %434 = vmatpush.msra.mxu0 0.0
    %435 = vmatpush.msra.mxu0 0.0
    %436 = vmatpush.msra.mxu0 0.0
    %437 = vmatpush.msra.mxu0 0.0
    %438 = vmatpush.msra.mxu0 0.0
    %439 = vmatpush.msra.mxu0 0.0
    %440 = vmatpush.msra.mxu0 0.0
    %441 = vmatpush.msra.mxu0 0.0
    %442 = vmatpush.msra.mxu0 0.0
    %443 = vmatpush.msra.mxu0 0.0
    %v444 = vand.u32 %v388, 4294901760
    %445 = vmatpush.msra.mxu0 %v444
    %v446 = vand.u32 %v387, 4294901760
    %447 = vmatpush.msra.mxu0 %v446
    %v448 = vand.u32 %v419, 4294901760
    %v449 = vsub.f32 %v419, %v448
    %v450 = vand.u32 %v449, 4294901760
    %v451 = vsub.f32 %v449, %v450
    %v452 = vand.u32 %v451, 4294901760
    %453 = vmatmul.f32.gmra.mxu0 %v452
    %v454 = vpop.f32.mrf.mxu0
    %v455 = vadd.f32 %v400, %v454
    %v456 = vand.u32 %v422, 4294901760
    %v457 = vsub.f32 %v422, %v456
    %v458 = vand.u32 %v457, 4294901760
    %v459 = vsub.f32 %v457, %v458
    %v460 = vand.u32 %v459, 4294901760
    %461 = vmatmul.f32.gmra.mxu0 %v460
    %v462 = vpop.f32.mrf.mxu0
    %v463 = vadd.f32 %v405, %v462
    %v464 = vand.u32 %v425, 4294901760
    %v465 = vsub.f32 %v425, %v464
    %v466 = vand.u32 %v465, 4294901760
    %v467 = vsub.f32 %v465, %v466
    %v468 = vand.u32 %v467, 4294901760
    %469 = vmatmul.f32.gmra.mxu0 %v468
    %v470 = vpop.f32.mrf.mxu0
    %v471 = vadd.f32 %v410, %v470
    %v472 = vand.u32 %v428, 4294901760
    %v473 = vsub.f32 %v428, %v472
    %v474 = vand.u32 %v473, 4294901760
    %v475 = vsub.f32 %v473, %v474
    %v476 = vand.u32 %v475, 4294901760
    %477 = vmatmul.f32.gmra.mxu0 %v476
    %v478 = vpop.f32.mrf.mxu0
    %v479 = vadd.f32 %v415, %v478
    %480 = vdwg.mxu0
    %481 = vmatpush.msra.mxu0 0.0
    %482 = vmatpush.msra.mxu0 0.0
    %483 = vmatpush.msra.mxu0 0.0
    %484 = vmatpush.msra.mxu0 0.0
    %485 = vmatpush.msra.mxu0 0.0
    %486 = vmatpush.msra.mxu0 0.0
    %487 = vmatpush.msra.mxu0 0.0
    %488 = vmatpush.msra.mxu0 0.0
    %489 = vmatpush.msra.mxu0 0.0
    %490 = vmatpush.msra.mxu0 0.0
    %491 = vmatpush.msra.mxu0 0.0
    %492 = vmatpush.msra.mxu0 0.0
    %493 = vmatpush.msra.mxu0 0.0
    %494 = vmatpush.msra.mxu0 0.0
    %v495 = vand.u32 %v388, 4294901760
    %v496 = vsub.f32 %v388, %v495
    %v497 = vand.u32 %v496, 4294901760
    %v498 = vsub.f32 %v496, %v497
    %v499 = vand.u32 %v498, 4294901760
    %500 = vmatpush.msra.mxu0 %v499
    %v501 = vand.u32 %v387, 4294901760
    %v502 = vsub.f32 %v387, %v501
    %v503 = vand.u32 %v502, 4294901760
    %v504 = vsub.f32 %v502, %v503
    %v505 = vand.u32 %v504, 4294901760
    %506 = vmatpush.msra.mxu0 %v505
    %v507 = vand.u32 %v419, 4294901760
    %508 = vmatmul.f32.gmra.mxu0 %v507
    %v509 = vpop.f32.mrf.mxu0
    %v510 = vadd.f32 %v455, %v509
    %v511 = vand.u32 %v422, 4294901760
    %512 = vmatmul.f32.gmra.mxu0 %v511
    %v513 = vpop.f32.mrf.mxu0
    %v514 = vadd.f32 %v463, %v513
    %v515 = vand.u32 %v425, 4294901760
    %516 = vmatmul.f32.gmra.mxu0 %v515
    %v517 = vpop.f32.mrf.mxu0
    %v518 = vadd.f32 %v471, %v517
    %v519 = vand.u32 %v428, 4294901760
    %520 = vmatmul.f32.gmra.mxu0 %v519
    %v521 = vpop.f32.mrf.mxu0
    %v522 = vadd.f32 %v479, %v521
    %523 = vdwg.mxu0
    %524 = vmatpush.msra.mxu0 0.0
    %525 = vmatpush.msra.mxu0 0.0
    %526 = vmatpush.msra.mxu0 0.0
    %527 = vmatpush.msra.mxu0 0.0
    %528 = vmatpush.msra.mxu0 0.0
    %529 = vmatpush.msra.mxu0 0.0
    %530 = vmatpush.msra.mxu0 0.0
    %531 = vmatpush.msra.mxu0 0.0
    %532 = vmatpush.msra.mxu0 0.0
    %533 = vmatpush.msra.mxu0 0.0
    %534 = vmatpush.msra.mxu0 0.0
    %535 = vmatpush.msra.mxu0 0.0
    %536 = vmatpush.msra.mxu0 0.0
    %537 = vmatpush.msra.mxu0 0.0
    %v538 = vand.u32 %v388, 4294901760
    %v539 = vsub.f32 %v388, %v538
    %540 = vmatpush.msra.mxu0 %v539
    %v541 = vand.u32 %v387, 4294901760
    %v542 = vsub.f32 %v387, %v541
    %543 = vmatpush.msra.mxu0 %v542
    %v544 = vand.u32 %v419, 4294901760
    %v545 = vsub.f32 %v419, %v544
    %546 = vmatmul.f32.gmra.mxu0 %v545
    %v547 = vpop.f32.mrf.mxu0
    %v548 = vadd.f32 %v510, %v547
    %v549 = vand.u32 %v422, 4294901760
    %v550 = vsub.f32 %v422, %v549
    %551 = vmatmul.f32.gmra.mxu0 %v550
    %v552 = vpop.f32.mrf.mxu0
    %v553 = vadd.f32 %v514, %v552
    %v554 = vand.u32 %v425, 4294901760
    %v555 = vsub.f32 %v425, %v554
    %556 = vmatmul.f32.gmra.mxu0 %v555
    %v557 = vpop.f32.mrf.mxu0
    %v558 = vadd.f32 %v518, %v557
    %v559 = vand.u32 %v428, 4294901760
    %v560 = vsub.f32 %v428, %v559
    %561 = vmatmul.f32.gmra.mxu0 %v560
    %v562 = vpop.f32.mrf.mxu0
    %v563 = vadd.f32 %v522, %v562
    %564 = vdwg.mxu0
    %565 = vmatpush.msra.mxu0 0.0
    %566 = vmatpush.msra.mxu0 0.0
    %567 = vmatpush.msra.mxu0 0.0
    %568 = vmatpush.msra.mxu0 0.0
    %569 = vmatpush.msra.mxu0 0.0
    %570 = vmatpush.msra.mxu0 0.0
    %571 = vmatpush.msra.mxu0 0.0
    %572 = vmatpush.msra.mxu0 0.0
    %573 = vmatpush.msra.mxu0 0.0
    %574 = vmatpush.msra.mxu0 0.0
    %575 = vmatpush.msra.mxu0 0.0
    %576 = vmatpush.msra.mxu0 0.0
    %577 = vmatpush.msra.mxu0 0.0
    %578 = vmatpush.msra.mxu0 0.0
    %v579 = vand.u32 %v388, 4294901760
    %580 = vmatpush.msra.mxu0 %v579
    %v581 = vand.u32 %v387, 4294901760
    %582 = vmatpush.msra.mxu0 %v581
    %v583 = vand.u32 %v419, 4294901760
    %v584 = vsub.f32 %v419, %v583
    %v585 = vand.u32 %v584, 4294901760
    %586 = vmatmul.f32.gmra.mxu0 %v585
    %v587 = vpop.f32.mrf.mxu0
    %v588 = vadd.f32 %v548, %v587
    %v589 = vand.u32 %v422, 4294901760
    %v590 = vsub.f32 %v422, %v589
    %v591 = vand.u32 %v590, 4294901760
    %592 = vmatmul.f32.gmra.mxu0 %v591
    %v593 = vpop.f32.mrf.mxu0
    %v594 = vadd.f32 %v553, %v593
    %v595 = vand.u32 %v425, 4294901760
    %v596 = vsub.f32 %v425, %v595
    %v597 = vand.u32 %v596, 4294901760
    %598 = vmatmul.f32.gmra.mxu0 %v597
    %v599 = vpop.f32.mrf.mxu0
    %v600 = vadd.f32 %v558, %v599
    %v601 = vand.u32 %v428, 4294901760
    %v602 = vsub.f32 %v428, %v601
    %v603 = vand.u32 %v602, 4294901760
    %604 = vmatmul.f32.gmra.mxu0 %v603
    %v605 = vpop.f32.mrf.mxu0
    %v606 = vadd.f32 %v563, %v605
    %607 = vdwg.mxu0
    %608 = vmatpush.msra.mxu0 0.0
    %609 = vmatpush.msra.mxu0 0.0
    %610 = vmatpush.msra.mxu0 0.0
    %611 = vmatpush.msra.mxu0 0.0
    %612 = vmatpush.msra.mxu0 0.0
    %613 = vmatpush.msra.mxu0 0.0
    %614 = vmatpush.msra.mxu0 0.0
    %615 = vmatpush.msra.mxu0 0.0
    %616 = vmatpush.msra.mxu0 0.0
    %617 = vmatpush.msra.mxu0 0.0
    %618 = vmatpush.msra.mxu0 0.0
    %619 = vmatpush.msra.mxu0 0.0
    %620 = vmatpush.msra.mxu0 0.0
    %621 = vmatpush.msra.mxu0 0.0
    %v622 = vand.u32 %v388, 4294901760
    %v623 = vsub.f32 %v388, %v622
    %v624 = vand.u32 %v623, 4294901760
    %625 = vmatpush.msra.mxu0 %v624
    %v626 = vand.u32 %v387, 4294901760
    %v627 = vsub.f32 %v387, %v626
    %v628 = vand.u32 %v627, 4294901760
    %629 = vmatpush.msra.mxu0 %v628
    %v630 = vand.u32 %v419, 4294901760
    %631 = vmatmul.f32.gmra.mxu0 %v630
    %v632 = vpop.f32.mrf.mxu0
    %v633 = vadd.f32 %v588, %v632
    %v634 = vand.u32 %v422, 4294901760
    %635 = vmatmul.f32.gmra.mxu0 %v634
    %v636 = vpop.f32.mrf.mxu0
    %v637 = vadd.f32 %v594, %v636
    %v638 = vand.u32 %v425, 4294901760
    %639 = vmatmul.f32.gmra.mxu0 %v638
    %v640 = vpop.f32.mrf.mxu0
    %v641 = vadd.f32 %v600, %v640
    %v642 = vand.u32 %v428, 4294901760
    %643 = vmatmul.f32.gmra.mxu0 %v642
    %v644 = vpop.f32.mrf.mxu0
    %v645 = vadd.f32 %v606, %v644
    %646 = vdwg.mxu0
    %647 = vmatpush.msra.mxu0 0.0
    %648 = vmatpush.msra.mxu0 0.0
    %649 = vmatpush.msra.mxu0 0.0
    %650 = vmatpush.msra.mxu0 0.0
    %651 = vmatpush.msra.mxu0 0.0
    %652 = vmatpush.msra.mxu0 0.0
    %653 = vmatpush.msra.mxu0 0.0
    %654 = vmatpush.msra.mxu0 0.0
    %655 = vmatpush.msra.mxu0 0.0
    %656 = vmatpush.msra.mxu0 0.0
    %657 = vmatpush.msra.mxu0 0.0
    %658 = vmatpush.msra.mxu0 0.0
    %659 = vmatpush.msra.mxu0 0.0
    %660 = vmatpush.msra.mxu0 0.0
    %v661 = vand.u32 %v388, 4294901760
    %662 = vmatpush.msra.mxu0 %v661
    %v663 = vand.u32 %v387, 4294901760
    %664 = vmatpush.msra.mxu0 %v663
    %v665 = vand.u32 %v419, 4294901760
    %666 = vmatmul.f32.gmra.mxu0 %v665
    %v667 = vpop.f32.mrf.mxu0
    %v668 = vadd.f32 %v633, %v667
    %v669 = vand.u32 %v422, 4294901760
    %670 = vmatmul.f32.gmra.mxu0 %v669
    %v671 = vpop.f32.mrf.mxu0
    %v672 = vadd.f32 %v637, %v671
    %v673 = vand.u32 %v425, 4294901760
    %674 = vmatmul.f32.gmra.mxu0 %v673
    %v675 = vpop.f32.mrf.mxu0
    %v676 = vadd.f32 %v641, %v675
    %v677 = vand.u32 %v428, 4294901760
    %678 = vmatmul.f32.gmra.mxu0 %v677
    %v679 = vpop.f32.mrf.mxu0
    %v680 = vadd.f32 %v645, %v679
    %681 = vdwg.mxu0
    %682 = vxpose.xlu0.b32.start [1/16] %v668, 128
    %683 = vxpose.xlu0.b32.cont [2/16] %v672, 128
    %684 = vxpose.xlu0.b32.cont [3/16] %v676, 128
    %685 = vxpose.xlu0.b32.cont [4/16] %v680, 128
    %686 = vxpose.xlu0.b32.cont [5/16] 0.0, 128
    %687 = vxpose.xlu0.b32.cont [6/16] 0.0, 128
    %688 = vxpose.xlu0.b32.cont [7/16] 0.0, 128
    %689 = vxpose.xlu0.b32.cont [8/16] 0.0, 128
    %690 = vxpose.xlu0.b32.cont [9/16] 0.0, 128
    %691 = vxpose.xlu0.b32.cont [10/16] 0.0, 128
    %692 = vxpose.xlu0.b32.cont [11/16] 0.0, 128
    %693 = vxpose.xlu0.b32.cont [12/16] 0.0, 128
    %694 = vxpose.xlu0.b32.cont [13/16] 0.0, 128
    %695 = vxpose.xlu0.b32.cont [14/16] 0.0, 128
    %696 = vxpose.xlu0.b32.cont [15/16] 0.0, 128
    %697 = vxpose.xlu0.b32.end [16/16] 0.0, 128
    %v698 = vpop.trf.xlu0
    %v699 = vpop.trf.xlu0
    %v700 = vpop.trf.xlu0
    %v701 = vpop.trf.xlu0
    %v702 = vpop.trf.xlu0
    %v703 = vpop.trf.xlu0
    %v704 = vpop.trf.xlu0
    %v705 = vpop.trf.xlu0
    %v706 = vpop.trf.xlu0
    %v707 = vpop.trf.xlu0
    %v708 = vpop.trf.xlu0
    %v709 = vpop.trf.xlu0
    %v710 = vpop.trf.xlu0
    %v711 = vpop.trf.xlu0
    %v712 = vpop.trf.xlu0
    %v713 = vpop.trf.xlu0
    %vm714 = vcmask 261120
    %715 = vst.msk [vmem:[#allocation2] sm:$0xff] %vm714, %v698
    // Predicated region
    $region30: #{tpu_custom_call.1} parent=1 // pred_check
      _
    $region31: #{tpu_custom_call.1} parent=1 // pred_check_branch
      %717 = sbr.rel (0) target = $region33
    $region32: #{tpu_custom_call.1} parent=1 // pred_region
      %719 = vsyncadd [#allocation3], 0
      %s721 = sshll.u32 [#allocation2], 4
      %s722 = int_to_ptr.vmem [resolvable:$true] %s721
      %s723 = sshll.u32 %s7, 4
      %s724 = int_to_ptr.hbm [resolvable:$true] %s723
      %726 = dma.vmem_to_hbm [thread:$0]  %s722, 128, %s724, [#allocation3]
    $region33: #{tpu_custom_call.1} parent=1 // pred_fallthru
      _
    // Predicated region
    $region34: #{tpu_custom_call.1} parent=1 // pred_check
      _
    $region35: #{tpu_custom_call.1} parent=1 // pred_check_branch
      %728 = sbr.rel (0) target = $region37
    $region36: #{tpu_custom_call.1} parent=1 // pred_region
      %730 = dma.done [#allocation3], 128
    $region37: #{tpu_custom_call.1} parent=1 // pred_fallthru
      _
    %731 = vsyncpa [#allocation3], 1

</llo_original>
